<compile_context>
chip_gen: v7x
topology: tpu7x:2x2x1
jax: 0.10.0
libtpu: 0.0.40
codegen_flags: <defaults>
</compile_context>

<pallas_src>
import functools
import math

import jax
import jax.numpy as jnp
from jax.experimental import pallas as pl
from jax.experimental.pallas import tpu as pltpu


def _round_up(x, m):
    return (x + m - 1) // m * m


# ---------------------------------------------------------------------------
# Parameter init (xavier_uniform weights like the module, torch-default bias).
# ---------------------------------------------------------------------------
def _xavier_uniform(key, fan_in, fan_out):
    bound = math.sqrt(6.0 / (fan_in + fan_out))
    # stored as (in, out) so the kernel can do  h @ W  (== PyTorch x @ W.T)
    return jax.random.uniform(
        key, (fan_in, fan_out), jnp.float32, minval=-bound, maxval=bound
    )


def _torch_default_bias(key, fan_in, fan_out):
    bound = 1.0 / math.sqrt(float(fan_in))
    return jax.random.uniform(
        key, (fan_out,), jnp.float32, minval=-bound, maxval=bound
    )


def init_np_encoder_params(key, hidden_size, z_size, encoder_layers=(2, 4, 8)):
    layers = [hidden_size] + list(encoder_layers)
    enc_ws, enc_bs = [], []
    for i in range(len(layers) - 1):
        key, kw, kb = jax.random.split(key, 3)
        enc_ws.append(_xavier_uniform(kw, layers[i], layers[i + 1]))
        enc_bs.append(_torch_default_bias(kb, layers[i], layers[i + 1]))
    key, kw_mu, kb_mu, kw_ls, kb_ls = jax.random.split(key, 5)
    return {
        "enc_ws": enc_ws,
        "enc_bs": enc_bs,
        "w_mu": _xavier_uniform(kw_mu, layers[-1], z_size),
        "b_mu": _torch_default_bias(kb_mu, layers[-1], z_size),
        "w_ls": _xavier_uniform(kw_ls, layers[-1], z_size),
        "b_ls": _torch_default_bias(kb_ls, layers[-1], z_size),
    }


# ---------------------------------------------------------------------------
# Pack all parameters into ONE small f32 array (one DMA, constant index_map).
#   * layer 0 is the FOLDED first layer: tile(W1, N)/N with shape (N*H, f1),
#     so the point-mean + first linear is a single lane-dense MXU matmul.
#   * the mu / logsgm heads are fused into one (8, 2z) weight.
#   * each [W ; b] block is padded to a multiple of 8 rows so every in-kernel
#     slice starts sublane-aligned (no relayout copies).
# Returns (packed, layer_specs, n_relu) with layer_specs = ((row, fi, fo), ...)
# ---------------------------------------------------------------------------
def _pack_params(params, n_points):
    w1 = params["enc_ws"][0]
    w1_folded = jnp.tile(w1, (n_points, 1)) / float(n_points)      # (N*H, f1)
    w_head = jnp.concatenate([params["w_mu"], params["w_ls"]], axis=1)   # (8, 2z)
    b_head = jnp.concatenate([params["b_mu"], params["b_ls"]], axis=0)   # (2z,)

    ws = [w1_folded] + list(params["enc_ws"][1:]) + [w_head]
    bs = [params["enc_bs"][0]] + list(params["enc_bs"][1:]) + [b_head]
    c = max(int(w.shape[1]) for w in ws)

    blocks, specs, row = [], [], 0
    for w, b in zip(ws, bs):
        fi, fo = int(w.shape[0]), int(w.shape[1])
        wb = jnp.concatenate([w, b.reshape(1, fo)], axis=0)         # (fi + 1, fo)
        rows = _round_up(fi + 1, 8)                                 # sublane-align
        wb = jnp.pad(wb, ((0, rows - (fi + 1)), (0, c - fo)))
        blocks.append(wb)
        specs.append((row, fi, fo))
        row += rows
    packed = jnp.concatenate(blocks, axis=0).astype(jnp.float32)    # (R, C)
    n_relu = len(params["enc_ws"]) - 1   # ReLU after all enc layers but the last
    return packed, tuple(specs), n_relu


# ---------------------------------------------------------------------------
# Pallas kernel: one B-tile per grid step.
# ---------------------------------------------------------------------------
def _encoder_kernel(layer_specs, n_relu, z, r_ref, p_ref, out_ref):
    # r_ref: (TB, N*H) lane-dense tile (any float dtype; upcast after the DMA
    # so a bf16 producer halves HBM traffic).  p_ref: (R, C).  out_ref: (TB, 2z).
    h = r_ref[...].astype(jnp.float32)
    p = p_ref[...]                                        # tiny, resident
    # TODO(synk): if a bundle dump ever shows the folded first matmul on the
    # critical path, pack a bf16 copy of W1 and feed the MXU bf16 x bf16.
    for i, (off, fi, fo) in enumerate(layer_specs):
        w = p[off:off + fi, :fo]                          # static, aligned slice
        b = p[off + fi, :fo]                              # (fo,)
        h = jnp.dot(h, w, preferred_element_type=jnp.float32) + b
        if i < n_relu:
            h = jnp.maximum(h, 0.0)

    # h = [mu | logsgm] on the lane axis; apply 0.1 + 0.9*softplus to the
    # right half only (lane select avoids slice/concat relayouts).
    lane = jax.lax.broadcasted_iota(jnp.int32, h.shape, 1)
    softplus = jnp.maximum(h, 0.0) + jnp.log1p(jnp.exp(-jnp.abs(h)))
    out_ref[...] = jnp.where(lane < z, h, 0.1 + 0.9 * softplus)


# ---------------------------------------------------------------------------
# Batch-tile selection: bytes-per-tile target, VMEM-aware, >= 2 grid steps
# when B allows it (v7x has 2 TensorCores).
# ---------------------------------------------------------------------------
def _pick_tb(B, K, itemsize, tb, vmem_budget_bytes, target_tile_bytes):
    sub = max(8, 32 // itemsize)                 # sublane multiple: 8 f32, 16 bf16
    if tb is None:
        row_bytes = max(K * itemsize, 1)                     # real HBM bytes / row
        row_bytes_vmem = _round_up(K, 128) * itemsize        # lane-padded VMEM bytes
        # ~target_tile_bytes of input per grid step amortizes the ~0.35us
        # fixed per-step overhead (matters most on v7x @ 3.2 TB/s HBM).
        tb = max(sub, (target_tile_bytes // row_bytes) // sub * sub)
        # keep 2 double-buffered input tiles (+ small fixed) under the budget
        cap = ((vmem_budget_bytes - (4 << 20)) // (2 * row_bytes_vmem)) // sub * sub
        tb = min(tb, max(sub, cap))
    tb = max(sub, _round_up(int(tb), sub))
    # give both v7x TensorCores work: >= 2 grid steps whenever B allows it
    if B > sub:
        tb = min(tb, _round_up(pl.cdiv(B, 2), sub))
    tb = min(tb, _round_up(B, sub))
    return tb


def np_encoder_forward(r_vector, params, *, tb=None,
                       vmem_budget_bytes=32 << 20,
                       target_tile_bytes=2 << 20):
    """Returns (mu, sgm) of the Normal distribution produced by NPEncoder."""
    B, N, H = r_vector.shape
    z = int(params["w_mu"].shape[1])
    assert int(params["enc_ws"][0].shape[0]) == H
    packed, layer_specs, n_relu = _pack_params(params, N)

    K = N * H
    r2 = r_vector.reshape(B, K)              # contiguous reshape: no HBM copy
    itemsize = r2.dtype.itemsize
    tb = _pick_tb(B, K, itemsize, tb, vmem_budget_bytes, target_tile_bytes)
    grid = (pl.cdiv(B, tb),)                 # ragged last block, no pad copy

    # Explicit scoped-VMEM limit: double-buffered input + output + params + headroom.
    vmem_need = (2 * tb * _round_up(K, 128) * itemsize
                 + 2 * tb * _round_up(2 * z, 128) * 4
                 + 2 * packed.shape[0] * _round_up(packed.shape[1], 128) * 4)
    vmem_limit = int(min(max(vmem_need + (8 << 20), 16 << 20), 64 << 20))

    out = pl.pallas_call(
        functools.partial(_encoder_kernel, layer_specs, n_relu, z),
        out_shape=jax.ShapeDtypeStruct((B, 2 * z), jnp.float32),
        grid=grid,
        in_specs=[
            pl.BlockSpec((tb, K), lambda i: (i, 0)),
            pl.BlockSpec(packed.shape, lambda i: (0, 0)),   # params resident
        ],
        out_specs=pl.BlockSpec((tb, 2 * z), lambda i: (i, 0)),
        compiler_params=pltpu.CompilerParams(
            dimension_semantics=("parallel",),
            vmem_limit_bytes=vmem_limit,
        ),
    )(r2, packed)

    mu = out[:, :z].reshape(B, 1, z)
    sgm = out[:, z:].reshape(B, 1, z)
    return mu, sgm


# ---------------------------------------------------------------------------
# Pure-JAX reference for verification
# ---------------------------------------------------------------------------
def np_encoder_reference(r_vector, params):
    h = jnp.mean(r_vector.astype(jnp.float32), axis=1)  # (B, H)
    n_enc = len(params["enc_ws"])
    for i, (w, b) in enumerate(zip(params["enc_ws"], params["enc_bs"])):
        h = h @ w + b
        if i < n_enc - 1:
            h = jax.nn.relu(h)
    mu = h @ params["w_mu"] + params["b_mu"]
    logsgm = h @ params["w_ls"] + params["b_ls"]
    sgm = 0.1 + 0.9 * jax.nn.softplus(logsgm)
    return mu[:, None, :], sgm[:, None, :]


if __name__ == "__main__":
    key = jax.random.PRNGKey(0)
    k_params, k_x, k_x2 = jax.random.split(key, 3)

    N = 8
    hidden_size = 32            # = embed_layers[-1] feeding the latent encoder
    z_size = 4
    encoder_layers = (2, 4, 8)  # NPEncoder default

    params = init_np_encoder_params(k_params, hidden_size, z_size, encoder_layers)

    # --- small case: single (ragged) tile, B < TB ---
    B = 2
    r_vector = jax.random.normal(k_x, (B, N, hidden_size), jnp.float32)
    mu, sgm = np_encoder_forward(r_vector, params)
    jax.block_until_ready((mu, sgm))
    mu_ref, sgm_ref = np_encoder_reference(r_vector, params)
    assert mu.shape == (B, 1, z_size) and sgm.shape == (B, 1, z_size)
    assert jnp.allclose(mu, mu_ref, atol=1e-4, rtol=1e-4)
    assert jnp.allclose(sgm, sgm_ref, atol=1e-4, rtol=1e-4)
    assert bool(jnp.all(sgm > 0.0))  # valid Normal scale

    # --- multi-tile grid with a ragged last block (no wrapper pad copy) ---
    B2 = 20
    r2 = jax.random.normal(k_x2, (B2, N, hidden_size), jnp.float32)
    mu2, sgm2 = np_encoder_forward(r2, params, tb=8)
    jax.block_until_ready((mu2, sgm2))
    mu2_ref, sgm2_ref = np_encoder_reference(r2, params)
    assert mu2.shape == (B2, 1, z_size) and sgm2.shape == (B2, 1, z_size)
    assert jnp.allclose(mu2, mu2_ref, atol=1e-4, rtol=1e-4)
    assert jnp.allclose(sgm2, sgm2_ref, atol=1e-4, rtol=1e-4)

    # --- bf16 producer path: no wrapper astype, upcast happens per-tile in VMEM ---
    r2_bf16 = r2.astype(jnp.bfloat16)
    mu3, sgm3 = np_encoder_forward(r2_bf16, params)
    jax.block_until_ready((mu3, sgm3))
    mu3_ref, sgm3_ref = np_encoder_reference(r2_bf16, params)
    assert jnp.allclose(mu3, mu3_ref, atol=5e-4, rtol=5e-4)
    assert jnp.allclose(sgm3, sgm3_ref, atol=5e-4, rtol=5e-4)

    # TODO(synk): torch.distributions.Normal / rsample / kl_divergence and the
    # rest of NPModel (embedders, decoder, loss) are host-level orchestration
    # around this encoder kernel and are not kernelized here.
    print("KERNEL_OK")
</pallas_src>

<mosaic_0001>
module attributes {stable_mosaic.version = 11 : i64} {
  func.func @_encoder_kernel(%arg0: i32, %arg1: memref<8x256xf32, #tpu.memory_space<vmem>>, %arg2: memref<296x8xf32, #tpu.memory_space<vmem>>, %arg3: memref<8x8xf32, #tpu.memory_space<vmem>>) attributes {dimension_semantics = [#tpu.dimension_semantics<parallel>], iteration_bounds = array<i64: 1>, scalar_prefetch = 0 : i64, scratch_operands = 0 : i64, tpu.core_type = #tpu.core_type<tc>, window_params = [{transform_indices = @transform_0, window_bounds = array<i64: 8, 256>}, {pipeline_mode = #tpu.pipeline_mode<synchronous>, transform_indices = @transform_1, window_bounds = array<i64: 296, 8>}, {transform_indices = @transform_2, window_bounds = array<i64: 8, 8>}]} {
    %c0 = arith.constant 0 : index
    %c0_0 = arith.constant 0 : index
    %0 = vector.load %arg1[%c0, %c0_0] : memref<8x256xf32, #tpu.memory_space<vmem>>, vector<8x256xf32>
    %c0_1 = arith.constant 0 : index
    %c0_2 = arith.constant 0 : index
    %1 = vector.load %arg2[%c0_1, %c0_2] : memref<296x8xf32, #tpu.memory_space<vmem>>, vector<296x8xf32>
    %2 = vector.extract_strided_slice %1 {offsets = [0, 0], sizes = [256, 2], strides = [1, 1]} : vector<296x8xf32> to vector<256x2xf32>
    %3 = vector.extract_strided_slice %1 {offsets = [256, 0], sizes = [1, 2], strides = [1, 1]} : vector<296x8xf32> to vector<1x2xf32>
    %4 = vector.shape_cast %3 : vector<1x2xf32> to vector<2xf32>
    %cst = arith.constant dense<0.000000e+00> : vector<8x2xf32>
    %5 = tpu.matmul %0, %2, %cst {dimension_numbers = #tpu.dot_dimension_numbers<[1], [0], [0], [1], [0, 0, 1, 1], [], []>} : vector<8x256xf32>, vector<256x2xf32>, vector<8x2xf32> -> vector<8x2xf32>
    %6 = vector.shape_cast %4 : vector<2xf32> to vector<1x2xf32>
    %7 = vector.broadcast %6 : vector<1x2xf32> to vector<8x2xf32>
    %8 = arith.addf %5, %7 : vector<8x2xf32>
    %cst_3 = arith.constant 0.000000e+00 : f32
    %9 = vector.broadcast %cst_3 : f32 to vector<8x2xf32>
    %10 = arith.maximumf %8, %9 : vector<8x2xf32>
    %11 = vector.extract_strided_slice %1 {offsets = [264, 0], sizes = [2, 4], strides = [1, 1]} : vector<296x8xf32> to vector<2x4xf32>
    %12 = vector.extract_strided_slice %1 {offsets = [266, 0], sizes = [1, 4], strides = [1, 1]} : vector<296x8xf32> to vector<1x4xf32>
    %13 = vector.shape_cast %12 : vector<1x4xf32> to vector<4xf32>
    %cst_4 = arith.constant dense<0.000000e+00> : vector<8x4xf32>
    %14 = tpu.matmul %10, %11, %cst_4 {dimension_numbers = #tpu.dot_dimension_numbers<[1], [0], [0], [1], [0, 0, 1, 1], [], []>} : vector<8x2xf32>, vector<2x4xf32>, vector<8x4xf32> -> vector<8x4xf32>
    %15 = vector.shape_cast %13 : vector<4xf32> to vector<1x4xf32>
    %16 = vector.broadcast %15 : vector<1x4xf32> to vector<8x4xf32>
    %17 = arith.addf %14, %16 : vector<8x4xf32>
    %cst_5 = arith.constant 0.000000e+00 : f32
    %18 = vector.broadcast %cst_5 : f32 to vector<8x4xf32>
    %19 = arith.maximumf %17, %18 : vector<8x4xf32>
    %20 = vector.extract_strided_slice %1 {offsets = [272, 0], sizes = [4, 8], strides = [1, 1]} : vector<296x8xf32> to vector<4x8xf32>
    %21 = vector.extract_strided_slice %1 {offsets = [276, 0], sizes = [1, 8], strides = [1, 1]} : vector<296x8xf32> to vector<1x8xf32>
    %22 = vector.shape_cast %21 : vector<1x8xf32> to vector<8xf32>
    %cst_6 = arith.constant dense<0.000000e+00> : vector<8x8xf32>
    %23 = tpu.matmul %19, %20, %cst_6 {dimension_numbers = #tpu.dot_dimension_numbers<[1], [0], [0], [1], [0, 0, 1, 1], [], []>} : vector<8x4xf32>, vector<4x8xf32>, vector<8x8xf32> -> vector<8x8xf32>
    %24 = vector.shape_cast %22 : vector<8xf32> to vector<1x8xf32>
    %25 = vector.broadcast %24 : vector<1x8xf32> to vector<8x8xf32>
    %26 = arith.addf %23, %25 : vector<8x8xf32>
    %27 = vector.extract_strided_slice %1 {offsets = [280, 0], sizes = [8, 8], strides = [1, 1]} : vector<296x8xf32> to vector<8x8xf32>
    %28 = vector.extract_strided_slice %1 {offsets = [288, 0], sizes = [1, 8], strides = [1, 1]} : vector<296x8xf32> to vector<1x8xf32>
    %29 = vector.shape_cast %28 : vector<1x8xf32> to vector<8xf32>
    %cst_7 = arith.constant dense<0.000000e+00> : vector<8x8xf32>
    %30 = tpu.matmul %26, %27, %cst_7 {dimension_numbers = #tpu.dot_dimension_numbers<[1], [0], [0], [1], [0, 0, 1, 1], [], []>} : vector<8x8xf32>, vector<8x8xf32>, vector<8x8xf32> -> vector<8x8xf32>
    %31 = vector.shape_cast %29 : vector<8xf32> to vector<1x8xf32>
    %32 = vector.broadcast %31 : vector<1x8xf32> to vector<8x8xf32>
    %33 = arith.addf %30, %32 : vector<8x8xf32>
    %34 = tpu.iota {dimensions = array<i32: 1>} : vector<8x8xi32>
    %cst_8 = arith.constant 0.000000e+00 : f32
    %35 = vector.broadcast %cst_8 : f32 to vector<8x8xf32>
    %36 = arith.maximumf %33, %35 : vector<8x8xf32>
    %37 = math.absf %33 : vector<8x8xf32>
    %cst_9 = arith.constant 0.000000e+00 : f32
    %38 = vector.broadcast %cst_9 : f32 to vector<8x8xf32>
    %39 = arith.subf %38, %37 : vector<8x8xf32>
    %40 = math.exp %39 : vector<8x8xf32>
    %41 = math.log1p %40 : vector<8x8xf32>
    %42 = arith.addf %36, %41 : vector<8x8xf32>
    %c4_i32 = arith.constant 4 : i32
    %43 = vector.broadcast %c4_i32 : i32 to vector<8x8xi32>
    %44 = arith.cmpi slt, %34, %43 : vector<8x8xi32>
    %cst_10 = arith.constant 0.899999976 : f32
    %45 = vector.broadcast %cst_10 : f32 to vector<8x8xf32>
    %46 = arith.mulf %45, %42 : vector<8x8xf32>
    %cst_11 = arith.constant 1.000000e-01 : f32
    %47 = vector.broadcast %cst_11 : f32 to vector<8x8xf32>
    %48 = arith.addf %47, %46 : vector<8x8xf32>
    %49 = arith.select %44, %33, %48 : vector<8x8xi1>, vector<8x8xf32>
    %c0_12 = arith.constant 0 : index
    %c0_13 = arith.constant 0 : index
    %50 = vector.load %arg3[%c0_12, %c0_13] : memref<8x8xf32, #tpu.memory_space<vmem>>, vector<8x8xf32>
    tpu.vector_store %arg3[%c0_12, %c0_13], %49 {strides = array<i32>} : memref<8x8xf32, #tpu.memory_space<vmem>>, vector<8x8xf32>,
    return
  }
  func.func @transform_0(%arg0: i32) -> (i32, i32) {
    %c0_i32 = arith.constant 0 : i32
    %c0_i32_0 = arith.constant 0 : i32
    return %arg0, %c0_i32 : i32, i32
  }
  func.func @transform_1(%arg0: i32) -> (i32, i32) {
    %c0_i32 = arith.constant 0 : i32
    %c0_i32_0 = arith.constant 0 : i32
    %c0_i32_1 = arith.constant 0 : i32
    return %c0_i32, %c0_i32_0 : i32, i32
  }
  func.func @transform_2(%arg0: i32) -> (i32, i32) {
    %c0_i32 = arith.constant 0 : i32
    %c0_i32_0 = arith.constant 0 : i32
    return %arg0, %c0_i32 : i32, i32
  }
}

</mosaic_0001>

<llo_original>
// kernel: tpu_custom_call.1
$region0: #{tpu_custom_call.1}
  #allocation0 [shape = 'u32[]', space=smem, size = 0x4, offset = 0x4, fixed_abs, tag = 'smem constant byte address 0x4 - core index']
  #allocation1 [shape = 'u32[144,128]{1,0:T(1,128)}', space=vmem, size = 0x12000, scoped, tag = 'internal scratch']
  %s0 = inlined_call_operand.vmem [shape: f32[2,256], index: 0, kind: input, shape index: {}]
  %s1 = inlined_call_operand.vmem [shape: f32[296,8], index: 1, kind: input, shape index: {}]
  %s2 = inlined_call_operand.hbm [shape: f32[2,8], index: 2, kind: output, shape index: {}]
  %s3 = sld [smem:[#allocation0]]
  $region18: #{tpu_custom_call.1} parent=0
    _
  %s5 = ssub.s32 1, %s3
  %s6 = scalar_select 0, %s5, %s3
  $region1: #{tpu_custom_call.1} parent=0
    #allocation2 [shape = 'u8[4096]{0}', space=vmem, size = 0x1000, scoped, tag = 'output window, operand 0, single buffered']
    #allocation3 [shape = 's32[1]{0}', space=sflag, size = 0x4, scoped, tag = 'scoped memory for tpu_custom_call.1']
    %7 = vsyncpa [#allocation3], 0
    // Predicated region
    $region2: #{tpu_custom_call.1} parent=1 // pred_check
      _
    $region3: #{tpu_custom_call.1} parent=1 // pred_check_branch
      %9 = sbr.rel (0) target = $region5
    $region4: #{tpu_custom_call.1} parent=1 // pred_region
      _
    $region5: #{tpu_custom_call.1} parent=1 // pred_fallthru
      _
    // Predicated region
    $region6: #{tpu_custom_call.1} parent=1 // pred_check
      _
    $region7: #{tpu_custom_call.1} parent=1 // pred_check_branch
      %11 = sbr.rel (0) target = $region9
    $region8: #{tpu_custom_call.1} parent=1 // pred_region
      _
    $region9: #{tpu_custom_call.1} parent=1 // pred_fallthru
      _
    %v12 = vld [vmem:[%s0] sm:$0xf]
    %v13 = vld [vmem:[%s0 + $0x4] sm:$0xf]
    %v14 = vld [vmem:[%s0 + $0x8] sm:$0xf]
    %v15 = vld [vmem:[%s0 + $0xc] sm:$0xf]
    %v16 = vld [vmem:[%s1] sm:$0xff]
    %v17 = vld [vmem:[%s1 + $0x8] sm:$0xff]
    %v18 = vld [vmem:[%s1 + $0x10] sm:$0xff]
    %v19 = vld [vmem:[%s1 + $0x18] sm:$0xff]
    %v20 = vld [vmem:[%s1 + $0x20] sm:$0xff]
    %v21 = vld [vmem:[%s1 + $0x28] sm:$0xff]
    %v22 = vld [vmem:[%s1 + $0x30] sm:$0xff]
    %v23 = vld [vmem:[%s1 + $0x38] sm:$0xff]
    %v24 = vld [vmem:[%s1 + $0x40] sm:$0xff]
    %v25 = vld [vmem:[%s1 + $0x48] sm:$0xff]
    %v26 = vld [vmem:[%s1 + $0x50] sm:$0xff]
    %v27 = vld [vmem:[%s1 + $0x58] sm:$0xff]
    %v28 = vld [vmem:[%s1 + $0x60] sm:$0xff]
    %v29 = vld [vmem:[%s1 + $0x68] sm:$0xff]
    %v30 = vld [vmem:[%s1 + $0x70] sm:$0xff]
    %v31 = vld [vmem:[%s1 + $0x78] sm:$0xff]
    %v32 = vld [vmem:[%s1 + $0x80] sm:$0xff]
    %v33 = vld [vmem:[%s1 + $0x88] sm:$0xff]
    %v34 = vld [vmem:[%s1 + $0x90] sm:$0xff]
    %v35 = vld [vmem:[%s1 + $0x98] sm:$0xff]
    %v36 = vld [vmem:[%s1 + $0xa0] sm:$0xff]
    %v37 = vld [vmem:[%s1 + $0xa8] sm:$0xff]
    %v38 = vld [vmem:[%s1 + $0xb0] sm:$0xff]
    %v39 = vld [vmem:[%s1 + $0xb8] sm:$0xff]
    %v40 = vld [vmem:[%s1 + $0xc0] sm:$0xff]
    %v41 = vld [vmem:[%s1 + $0xc8] sm:$0xff]
    %v42 = vld [vmem:[%s1 + $0xd0] sm:$0xff]
    %v43 = vld [vmem:[%s1 + $0xd8] sm:$0xff]
    %v44 = vld [vmem:[%s1 + $0xe0] sm:$0xff]
    %v45 = vld [vmem:[%s1 + $0xe8] sm:$0xff]
    %v46 = vld [vmem:[%s1 + $0xf0] sm:$0xff]
    %v47 = vld [vmem:[%s1 + $0xf8] sm:$0xff]
    %v48 = vld [vmem:[%s1 + $0x100] sm:$0xff]
    %v49 = vld [vmem:[%s1 + $0x108] sm:$0xff]
    %v50 = vld [vmem:[%s1 + $0x110] sm:$0xff]
    %v51 = vld [vmem:[%s1 + $0x118] sm:$0xff]
    %v52 = vld [vmem:[%s1 + $0x120] sm:$0xff]
    %v53 = vlaneseq
    %v54 = vshrl.u32 %v53, 7
    %v55 = vsub.s32 0, %v54
    %v56 = vrot.slane %v48, %v55
    %v61 = vcombine.low %v12, %v13
    %v62 = vcombine.low %v14, %v15
    %v64 = vunpack.c.l.s4 1983009808
    %v65 = vunpack.c.0.s8 %v64
    %v66 = vlaneseq
    %v67 = vshrl.u32 %v66, 7
    %v68 = vsub.s32 %v65, %v67
    %v69 = vrot.slane %v61, %v68
    %v71 = vunpack.c.l.s4 1983009808
    %v72 = vunpack.c.0.s8 %v71
    %v73 = vlaneseq
    %v74 = vshrl.u32 %v73, 7
    %v75 = vsub.s32 %v72, %v74
    %v76 = vrot.slane %v62, %v75
    %v77 = vcombine.low %v69, %v76
    %v78 = vcombine.high %v69, %v76
    %81 = vmatprep.subr.mxu0 0.0
    %82 = vmatpush1.msra.mxu0 %v16
    %83 = vmatprep.subr.mxu0 0.0
    %84 = vmatpush1.msra.mxu0 %v17
    %85 = vmatprep.subr.mxu0 0.0
    %86 = vmatpush1.msra.mxu0 %v18
    %87 = vmatprep.subr.mxu0 0.0
    %88 = vmatpush1.msra.mxu0 %v19
    %89 = vmatprep.subr.mxu0 0.0
    %90 = vmatpush1.msra.mxu0 %v20
    %91 = vmatprep.subr.mxu0 0.0
    %92 = vmatpush1.msra.mxu0 %v21
    %93 = vmatprep.subr.mxu0 0.0
    %94 = vmatpush1.msra.mxu0 %v22
    %95 = vmatprep.subr.mxu0 0.0
    %96 = vmatpush1.msra.mxu0 %v23
    %97 = vmatprep.subr.mxu0 0.0
    %98 = vmatpush1.msra.mxu0 %v24
    %99 = vmatprep.subr.mxu0 0.0
    %100 = vmatpush1.msra.mxu0 %v25
    %101 = vmatprep.subr.mxu0 0.0
    %102 = vmatpush1.msra.mxu0 %v26
    %103 = vmatprep.subr.mxu0 0.0
    %104 = vmatpush1.msra.mxu0 %v27
    %105 = vmatprep.subr.mxu0 0.0
    %106 = vmatpush1.msra.mxu0 %v28
    %107 = vmatprep.subr.mxu0 0.0
    %108 = vmatpush1.msra.mxu0 %v29
    %109 = vmatprep.subr.mxu0 0.0
    %110 = vmatpush1.msra.mxu0 %v30
    %111 = vmatprep.subr.mxu0 0.0
    %112 = vmatpush1.msra.mxu0 %v31
    %113 = vmatprep.subr.mxu0 0.0
    %114 = vmatpush1.msra.mxu0 %v32
    %115 = vmatprep.subr.mxu0 0.0
    %116 = vmatpush1.msra.mxu0 %v33
    %117 = vmatprep.subr.mxu0 0.0
    %118 = vmatpush1.msra.mxu0 %v34
    %119 = vmatprep.subr.mxu0 0.0
    %120 = vmatpush1.msra.mxu0 %v35
    %121 = vmatprep.subr.mxu0 0.0
    %122 = vmatpush1.msra.mxu0 %v36
    %123 = vmatprep.subr.mxu0 0.0
    %124 = vmatpush1.msra.mxu0 %v37
    %125 = vmatprep.subr.mxu0 0.0
    %126 = vmatpush1.msra.mxu0 %v38
    %127 = vmatprep.subr.mxu0 0.0
    %128 = vmatpush1.msra.mxu0 %v39
    %129 = vmatprep.subr.mxu0 0.0
    %130 = vmatpush1.msra.mxu0 %v40
    %131 = vmatprep.subr.mxu0 0.0
    %132 = vmatpush1.msra.mxu0 %v41
    %133 = vmatprep.subr.mxu0 0.0
    %134 = vmatpush1.msra.mxu0 %v42
    %135 = vmatprep.subr.mxu0 0.0
    %136 = vmatpush1.msra.mxu0 %v43
    %137 = vmatprep.subr.mxu0 0.0
    %138 = vmatpush1.msra.mxu0 %v44
    %139 = vmatprep.subr.mxu0 0.0
    %140 = vmatpush1.msra.mxu0 %v45
    %141 = vmatprep.subr.mxu0 0.0
    %142 = vmatpush1.msra.mxu0 %v46
    %143 = vmatprep.subr.mxu0 0.0
    %144 = vmatpush1.msra.mxu0 %v47
    %145 = vmatprep.mubr.f32.mxu0 %v78
    %146 = vmatmul.mubr.f32.gmra.mrb[0].mxu0 %v77
    %v147 = vpop.f32.mrb[0].mxu0
    %v148 = vadd.f32 %v56, %v147
    %v149 = vpop.f32.mrb[0].mxu0
    %150 = vdwg.mxu0
    %v151 = vmax.f32 %v148, 0.0
    %v152 = vlaneseq
    %v153 = vshrl.u32 %v152, 7
    %v154 = vsub.s32 2, %v153
    %v155 = vrot.slane %v49, %v154
    %vm156 = vcmask 15360
    %v158 = vsel %vm156, %v151, 0
    %vm160 = vcmask 1041408
    %v162 = vsel %vm160, %v49, 0
    %164 = vmatprep.subr.mxu0 0.0
    %165 = vmatpush1.msra.mxu0 %v162
    %166 = vmatprep.subr.mxu0 0.0
    %167 = vmatpush1.msra.mxu0 0.0
    %168 = vmatprep.subr.mxu0 0.0
    %169 = vmatpush1.msra.mxu0 0.0
    %170 = vmatprep.subr.mxu0 0.0
    %171 = vmatpush1.msra.mxu0 0.0
    %172 = vmatprep.subr.mxu0 0.0
    %173 = vmatpush1.msra.mxu0 0.0
    %174 = vmatprep.subr.mxu0 0.0
    %175 = vmatpush1.msra.mxu0 0.0
    %176 = vmatprep.subr.mxu0 0.0
    %177 = vmatpush1.msra.mxu0 0.0
    %178 = vmatprep.subr.mxu0 0.0
    %179 = vmatpush1.msra.mxu0 0.0
    %180 = vmatprep.subr.mxu0 0.0
    %181 = vmatpush1.msra.mxu0 0.0
    %182 = vmatprep.subr.mxu0 0.0
    %183 = vmatpush1.msra.mxu0 0.0
    %184 = vmatprep.subr.mxu0 0.0
    %185 = vmatpush1.msra.mxu0 0.0
    %186 = vmatprep.subr.mxu0 0.0
    %187 = vmatpush1.msra.mxu0 0.0
    %188 = vmatprep.subr.mxu0 0.0
    %189 = vmatpush1.msra.mxu0 0.0
    %190 = vmatprep.subr.mxu0 0.0
    %191 = vmatpush1.msra.mxu0 0.0
    %192 = vmatprep.subr.mxu0 0.0
    %193 = vmatpush1.msra.mxu0 0.0
    %194 = vmatprep.subr.mxu0 0.0
    %195 = vmatpush1.msra.mxu0 0.0
    %196 = vmatprep.subr.mxu0 0.0
    %197 = vmatpush1.msra.mxu0 0.0
    %198 = vmatprep.subr.mxu0 0.0
    %199 = vmatpush1.msra.mxu0 0.0
    %200 = vmatprep.subr.mxu0 0.0
    %201 = vmatpush1.msra.mxu0 0.0
    %202 = vmatprep.subr.mxu0 0.0
    %203 = vmatpush1.msra.mxu0 0.0
    %204 = vmatprep.subr.mxu0 0.0
    %205 = vmatpush1.msra.mxu0 0.0
    %206 = vmatprep.subr.mxu0 0.0
    %207 = vmatpush1.msra.mxu0 0.0
    %208 = vmatprep.subr.mxu0 0.0
    %209 = vmatpush1.msra.mxu0 0.0
    %210 = vmatprep.subr.mxu0 0.0
    %211 = vmatpush1.msra.mxu0 0.0
    %212 = vmatprep.subr.mxu0 0.0
    %213 = vmatpush1.msra.mxu0 0.0
    %214 = vmatprep.subr.mxu0 0.0
    %215 = vmatpush1.msra.mxu0 0.0
    %216 = vmatprep.subr.mxu0 0.0
    %217 = vmatpush1.msra.mxu0 0.0
    %218 = vmatprep.subr.mxu0 0.0
    %219 = vmatpush1.msra.mxu0 0.0
    %220 = vmatprep.subr.mxu0 0.0
    %221 = vmatpush1.msra.mxu0 0.0
    %222 = vmatprep.subr.mxu0 0.0
    %223 = vmatpush1.msra.mxu0 0.0
    %224 = vmatprep.subr.mxu0 0.0
    %225 = vmatpush1.msra.mxu0 0.0
    %226 = vmatprep.subr.mxu0 0.0
    %227 = vmatpush1.msra.mxu0 0.0
    %228 = vmatprep.mubr.f32.mxu0 0.0
    %229 = vmatmul.mubr.f32.gmra.mrb[0].mxu0 %v158
    %v230 = vpop.f32.mrb[0].mxu0
    %v231 = vadd.f32 %v155, %v230
    %v232 = vpop.f32.mrb[0].mxu0
    %233 = vdwg.mxu0
    %v234 = vmax.f32 %v231, 0.0
    %v235 = vlaneseq
    %v236 = vshrl.u32 %v235, 7
    %v237 = vsub.s32 4, %v236
    %v238 = vrot.slane %v50, %v237
    %vm239 = vcmask 31744
    %v241 = vsel %vm239, %v234, 0
    %vm243 = vcmask 1043456
    %v245 = vsel %vm243, %v50, 0
    %247 = vmatprep.subr.mxu0 0.0
    %248 = vmatpush1.msra.mxu0 %v245
    %249 = vmatprep.subr.mxu0 0.0
    %250 = vmatpush1.msra.mxu0 0.0
    %251 = vmatprep.subr.mxu0 0.0
    %252 = vmatpush1.msra.mxu0 0.0
    %253 = vmatprep.subr.mxu0 0.0
    %254 = vmatpush1.msra.mxu0 0.0
    %255 = vmatprep.subr.mxu0 0.0
    %256 = vmatpush1.msra.mxu0 0.0
    %257 = vmatprep.subr.mxu0 0.0
    %258 = vmatpush1.msra.mxu0 0.0
    %259 = vmatprep.subr.mxu0 0.0
    %260 = vmatpush1.msra.mxu0 0.0
    %261 = vmatprep.subr.mxu0 0.0
    %262 = vmatpush1.msra.mxu0 0.0
    %263 = vmatprep.subr.mxu0 0.0
    %264 = vmatpush1.msra.mxu0 0.0
    %265 = vmatprep.subr.mxu0 0.0
    %266 = vmatpush1.msra.mxu0 0.0
    %267 = vmatprep.subr.mxu0 0.0
    %268 = vmatpush1.msra.mxu0 0.0
    %269 = vmatprep.subr.mxu0 0.0
    %270 = vmatpush1.msra.mxu0 0.0
    %271 = vmatprep.subr.mxu0 0.0
    %272 = vmatpush1.msra.mxu0 0.0
    %273 = vmatprep.subr.mxu0 0.0
    %274 = vmatpush1.msra.mxu0 0.0
    %275 = vmatprep.subr.mxu0 0.0
    %276 = vmatpush1.msra.mxu0 0.0
    %277 = vmatprep.subr.mxu0 0.0
    %278 = vmatpush1.msra.mxu0 0.0
    %279 = vmatprep.subr.mxu0 0.0
    %280 = vmatpush1.msra.mxu0 0.0
    %281 = vmatprep.subr.mxu0 0.0
    %282 = vmatpush1.msra.mxu0 0.0
    %283 = vmatprep.subr.mxu0 0.0
    %284 = vmatpush1.msra.mxu0 0.0
    %285 = vmatprep.subr.mxu0 0.0
    %286 = vmatpush1.msra.mxu0 0.0
    %287 = vmatprep.subr.mxu0 0.0
    %288 = vmatpush1.msra.mxu0 0.0
    %289 = vmatprep.subr.mxu0 0.0
    %290 = vmatpush1.msra.mxu0 0.0
    %291 = vmatprep.subr.mxu0 0.0
    %292 = vmatpush1.msra.mxu0 0.0
    %293 = vmatprep.subr.mxu0 0.0
    %294 = vmatpush1.msra.mxu0 0.0
    %295 = vmatprep.subr.mxu0 0.0
    %296 = vmatpush1.msra.mxu0 0.0
    %297 = vmatprep.subr.mxu0 0.0
    %298 = vmatpush1.msra.mxu0 0.0
    %299 = vmatprep.subr.mxu0 0.0
    %300 = vmatpush1.msra.mxu0 0.0
    %301 = vmatprep.subr.mxu0 0.0
    %302 = vmatpush1.msra.mxu0 0.0
    %303 = vmatprep.subr.mxu0 0.0
    %304 = vmatpush1.msra.mxu0 0.0
    %305 = vmatprep.subr.mxu0 0.0
    %306 = vmatpush1.msra.mxu0 0.0
    %307 = vmatprep.subr.mxu0 0.0
    %308 = vmatpush1.msra.mxu0 0.0
    %309 = vmatprep.subr.mxu0 0.0
    %310 = vmatpush1.msra.mxu0 0.0
    %311 = vmatprep.mubr.f32.mxu0 0.0
    %312 = vmatmul.mubr.f32.gmra.mrb[0].mxu0 %v241
    %v313 = vpop.f32.mrb[0].mxu0
    %v314 = vadd.f32 %v238, %v313
    %v315 = vpop.f32.mrb[0].mxu0
    %316 = vdwg.mxu0
    %v317 = vlaneseq
    %v318 = vshrl.u32 %v317, 7
    %v319 = vsub.s32 0, %v318
    %v320 = vrot.slane %v52, %v319
    %vm321 = vcmask 64512
    %v323 = vsel %vm321, %v314, 0
    %325 = vmatprep.subr.mxu0 0.0
    %326 = vmatpush1.msra.mxu0 %v51
    %327 = vmatprep.subr.mxu0 0.0
    %328 = vmatpush1.msra.mxu0 0.0
    %329 = vmatprep.subr.mxu0 0.0
    %330 = vmatpush1.msra.mxu0 0.0
    %331 = vmatprep.subr.mxu0 0.0
    %332 = vmatpush1.msra.mxu0 0.0
    %333 = vmatprep.subr.mxu0 0.0
    %334 = vmatpush1.msra.mxu0 0.0
    %335 = vmatprep.subr.mxu0 0.0
    %336 = vmatpush1.msra.mxu0 0.0
    %337 = vmatprep.subr.mxu0 0.0
    %338 = vmatpush1.msra.mxu0 0.0
    %339 = vmatprep.subr.mxu0 0.0
    %340 = vmatpush1.msra.mxu0 0.0
    %341 = vmatprep.subr.mxu0 0.0
    %342 = vmatpush1.msra.mxu0 0.0
    %343 = vmatprep.subr.mxu0 0.0
    %344 = vmatpush1.msra.mxu0 0.0
    %345 = vmatprep.subr.mxu0 0.0
    %346 = vmatpush1.msra.mxu0 0.0
    %347 = vmatprep.subr.mxu0 0.0
    %348 = vmatpush1.msra.mxu0 0.0
    %349 = vmatprep.subr.mxu0 0.0
    %350 = vmatpush1.msra.mxu0 0.0
    %351 = vmatprep.subr.mxu0 0.0
    %352 = vmatpush1.msra.mxu0 0.0
    %353 = vmatprep.subr.mxu0 0.0
    %354 = vmatpush1.msra.mxu0 0.0
    %355 = vmatprep.subr.mxu0 0.0
    %356 = vmatpush1.msra.mxu0 0.0
    %357 = vmatprep.subr.mxu0 0.0
    %358 = vmatpush1.msra.mxu0 0.0
    %359 = vmatprep.subr.mxu0 0.0
    %360 = vmatpush1.msra.mxu0 0.0
    %361 = vmatprep.subr.mxu0 0.0
    %362 = vmatpush1.msra.mxu0 0.0
    %363 = vmatprep.subr.mxu0 0.0
    %364 = vmatpush1.msra.mxu0 0.0
    %365 = vmatprep.subr.mxu0 0.0
    %366 = vmatpush1.msra.mxu0 0.0
    %367 = vmatprep.subr.mxu0 0.0
    %368 = vmatpush1.msra.mxu0 0.0
    %369 = vmatprep.subr.mxu0 0.0
    %370 = vmatpush1.msra.mxu0 0.0
    %371 = vmatprep.subr.mxu0 0.0
    %372 = vmatpush1.msra.mxu0 0.0
    %373 = vmatprep.subr.mxu0 0.0
    %374 = vmatpush1.msra.mxu0 0.0
    %375 = vmatprep.subr.mxu0 0.0
    %376 = vmatpush1.msra.mxu0 0.0
    %377 = vmatprep.subr.mxu0 0.0
    %378 = vmatpush1.msra.mxu0 0.0
    %379 = vmatprep.subr.mxu0 0.0
    %380 = vmatpush1.msra.mxu0 0.0
    %381 = vmatprep.subr.mxu0 0.0
    %382 = vmatpush1.msra.mxu0 0.0
    %383 = vmatprep.subr.mxu0 0.0
    %384 = vmatpush1.msra.mxu0 0.0
    %385 = vmatprep.subr.mxu0 0.0
    %386 = vmatpush1.msra.mxu0 0.0
    %387 = vmatprep.subr.mxu0 0.0
    %388 = vmatpush1.msra.mxu0 0.0
    %389 = vmatprep.mubr.f32.mxu0 0.0
    %390 = vmatmul.mubr.f32.gmra.mrb[0].mxu0 %v323
    %v391 = vpop.f32.mrb[0].mxu0
    %v392 = vadd.f32 %v320, %v391
    %v393 = vpop.f32.mrb[0].mxu0
    %394 = vdwg.mxu0
    %v395 = vlaneseq
    %v396 = vand.u32 %v395, 127
    %v397 = vmax.f32 %v392, 0.0
    %v398 = vand.u32 2147483647, %v392
    %v399 = vsub.f32 0.0, %v398
    %v400 = vmul.f32 %v399, 1.442695
    %v401 = vpow.pop %v400
    %v402 = vadd.f32 %v401, 1.0
    %v403 = vlog2.pop %v402
    %v404 = vmul.f32 %v403, 0.6931472
    %v405 = vmul.f32 -0.5, %v401
    %v406 = vadd.f32 %v405, 1.0
    %v407 = vmul.f32 %v406, %v401
    %v408 = vand.u32 2147483647, %v401
    %vm409 = vcmp.lt.f32.partialorder %v408, 0.0004427343
    %v410 = vsel %vm409, %v407, %v404
    %v411 = vadd.f32 %v397, %v410
    %vm412 = vcmp.lt.s32.totalorder %v396, 4
    %v413 = vmul.f32 %v411, 0.9
    %v414 = vadd.f32 %v413, 0.1
    %v415 = vsel %vm412, %v392, %v414
    %416 = vst.msk [vmem:[#allocation2] sm:$0xff] %vm321, %v415
    // Predicated region
    $region10: #{tpu_custom_call.1} parent=1 // pred_check
      _
    $region11: #{tpu_custom_call.1} parent=1 // pred_check_branch
      %418 = sbr.rel (0) target = $region13
    $region12: #{tpu_custom_call.1} parent=1 // pred_region
      %s420 = ssub.s32 128, 32
      %421 = vsyncadd [#allocation3], %s420
      %s422 = sshll.u32 [#allocation2], 4
      %s423 = int_to_ptr.vmem [resolvable:$true] %s422
      %428 = dma.vmem_to_hbm [thread:$0]  %s423, 32, %s2, [#allocation3], 32, 32, 2
    $region13: #{tpu_custom_call.1} parent=1 // pred_fallthru
      _
    // Predicated region
    $region14: #{tpu_custom_call.1} parent=1 // pred_check
      _
    $region15: #{tpu_custom_call.1} parent=1 // pred_check_branch
      %430 = sbr.rel (0) target = $region17
    $region16: #{tpu_custom_call.1} parent=1 // pred_region
      %431 = dma.done [#allocation3], 128
    $region17: #{tpu_custom_call.1} parent=1 // pred_fallthru
      _
    %432 = vsyncpa [#allocation3], 1

</llo_original>
